<compile_context>
chip_gen: v7x
topology: tpu7x:2x2x1
jax: 0.10.0
libtpu: 0.0.40
codegen_flags: <defaults>
</compile_context>

<pallas_src>
import jax
import jax.numpy as jnp
from jax.experimental import pallas as pl
from jax.experimental.pallas import tpu as pltpu


def _netc_kernel(x_ref, w1_ref, b1_ref, w2_ref, b2_ref, o_ref):
    # ---- Layer 1: tanh(x @ W1 + b1) ---------------------------------------
    # x / W1 arrive in the compute dtype (bf16 on v6e/v7x); MXU accumulates f32.
    pre = jnp.dot(x_ref[...], w1_ref[...], preferred_element_type=jnp.float32)
    h = jnp.tanh(pre + b1_ref[...].astype(jnp.float32))          # (tile_m, H) f32

    # ---- Layer 2: Linear(H -> 1) ------------------------------------------
    # VPU multiply + cross-lane reduce instead of an N=1 MXU pass; output is
    # written as a lane-dense (1, 1, tile_m) row (no masked 1-lane stores).
    y = jnp.sum(h * w2_ref[...].astype(jnp.float32), axis=-1)    # (tile_m,)
    y = y + b2_ref[0, 0]                                         # scalar bias (SMEM)
    o_ref[...] = y.reshape(o_ref.shape).astype(o_ref.dtype)


def netc_forward(x, w1, b1, w2, b2, *, tile_m=None,
                 compute_dtype=jnp.bfloat16, out_dtype=jnp.float32):
    """_netC forward.

    x : (B, inputSize)       w1: (inputSize, H)    b1: (1, H)
    w2: (1, H)  (PyTorch Linear(H, 1).weight layout)   b2: (1, 1)
    returns: (B, 1) in out_dtype
    """
    B, in_size = x.shape
    H = w1.shape[1]
    assert b1.shape == (1, H) and w2.shape == (1, H) and b2.shape == (1, 1)

    bpe = jnp.dtype(compute_dtype).itemsize

    # ---- choose the batch tile -------------------------------------------
    if tile_m is None:
        padded128 = pl.cdiv(max(B, 1), 128) * 128
        tile_m = min(512, padded128)
        # cap the double-buffered x tile at ~16 MiB of VMEM (safe on v7x's 64 MiB)
        while tile_m > 128 and 2 * tile_m * in_size * bpe > (16 << 20):
            tile_m = max(128, ((tile_m // 2) // 128) * 128)
        # keep >=2 grid steps when the batch allows it (v7x has 2 TensorCores)
        if padded128 // tile_m < 2 and padded128 >= 256:
            tile_m = max(128, ((padded128 // 2) // 128) * 128)
    assert tile_m % 128 == 0 and tile_m >= 128

    num_tiles = pl.cdiv(B, tile_m)
    P = num_tiles * tile_m

    # ---- cast / pad inputs --------------------------------------------------
    xc = x.astype(compute_dtype)
    if P != B:
        xc = jnp.pad(xc, ((0, P - B), (0, 0)))
    w1c = w1.astype(compute_dtype)
    b1f = b1.astype(jnp.float32)
    w2f = w2.astype(jnp.float32)
    b2f = b2.astype(jnp.float32)

    # ---- explicit VMEM budget (double buffers accounted for) ---------------
    need = (2 * tile_m * in_size * bpe       # x tile (double-buffered)
            + 2 * in_size * H * bpe          # W1 (resident, default 2x buffer)
            + 4 * H * 4                      # b1, w2 rows (f32)
            + 2 * tile_m * 4                 # output row (double-buffered)
            + (1 << 20))                     # slack
    vmem_limit = int(min(64 << 20, max(8 << 20, 2 * need)))

    out = pl.pallas_call(
        _netc_kernel,
        out_shape=jax.ShapeDtypeStruct((num_tiles, 1, tile_m), out_dtype),
        grid_spec=pltpu.PrefetchScalarGridSpec(
            num_scalar_prefetch=0,
            grid=(num_tiles,),
            in_specs=[
                pl.BlockSpec((tile_m, in_size), lambda i: (i, 0)),    # x tile
                pl.BlockSpec((in_size, H), lambda i: (0, 0)),         # W1 (whole)
                pl.BlockSpec((1, H), lambda i: (0, 0)),               # b1
                pl.BlockSpec((1, H), lambda i: (0, 0)),               # w2 row
                pl.BlockSpec(memory_space=pltpu.MemorySpace.SMEM),    # b2 scalar
            ],
            out_specs=pl.BlockSpec((1, 1, tile_m), lambda i: (i, 0, 0)),
        ),
        compiler_params=pltpu.CompilerParams(
            dimension_semantics=("parallel",),
            vmem_limit_bytes=vmem_limit,
        ),
    )(xc, w1c, b1f, w2f, b2f)

    # lane-dense (num_tiles, 1, tile_m) -> (B, 1)
    return out.reshape(P, 1)[:B]


def init_params(key, input_size, hidden_size, dtype=jnp.float32):
    """PyTorch-Linear-style init: uniform(-1/sqrt(fan_in), 1/sqrt(fan_in))."""
    k1, k2, k3, k4 = jax.random.split(key, 4)
    bound1 = 1.0 / (input_size ** 0.5)
    bound2 = 1.0 / (hidden_size ** 0.5)
    w1 = jax.random.uniform(k1, (input_size, hidden_size), dtype, -bound1, bound1)
    b1 = jax.random.uniform(k2, (1, hidden_size), dtype, -bound1, bound1)
    w2 = jax.random.uniform(k3, (1, hidden_size), dtype, -bound2, bound2)  # (1, H) = PyTorch layout
    b2 = jax.random.uniform(k4, (1, 1), dtype, -bound2, bound2)
    return w1, b1, w2, b2


if __name__ == "__main__":
    key = jax.random.PRNGKey(0)
    B, input_size, hidden_size = 8, 32, 32

    kx, kp = jax.random.split(key)
    x = jax.random.normal(kx, (B, input_size), jnp.float32)
    w1, b1, w2, b2 = init_params(kp, input_size, hidden_size)

    out = jax.block_until_ready(netc_forward(x, w1, b1, w2, b2))
    assert out.shape == (B, 1)

    # Reference (plain JAX) with the same bf16 rounding of the streamed operands.
    xr = x.astype(jnp.bfloat16).astype(jnp.float32)
    w1r = w1.astype(jnp.bfloat16).astype(jnp.float32)
    h = jnp.tanh(xr @ w1r + b1)
    ref = h @ w2.T + b2
    assert jnp.allclose(out, ref, atol=2e-3, rtol=2e-3), float(jnp.max(jnp.abs(out - ref)))

    print("KERNEL_OK")
</pallas_src>

<mosaic_0001>
module attributes {stable_mosaic.version = 11 : i64} {
  func.func @_netc_kernel(%arg0: i32, %arg1: memref<128x32xbf16, #tpu.memory_space<vmem>>, %arg2: memref<32x32xbf16, #tpu.memory_space<vmem>>, %arg3: memref<1x32xf32, #tpu.memory_space<vmem>>, %arg4: memref<1x32xf32, #tpu.memory_space<vmem>>, %arg5: memref<1x1xf32, #tpu.memory_space<smem>>, %arg6: memref<1x1x128xf32, #tpu.memory_space<vmem>>) attributes {dimension_semantics = [#tpu.dimension_semantics<parallel>], iteration_bounds = array<i64: 1>, scalar_prefetch = 0 : i64, scratch_operands = 0 : i64, tpu.core_type = #tpu.core_type<tc>, window_params = [{transform_indices = @transform_0, window_bounds = array<i64: 128, 32>}, {pipeline_mode = #tpu.pipeline_mode<synchronous>, transform_indices = @transform_1, window_bounds = array<i64: 32, 32>}, {pipeline_mode = #tpu.pipeline_mode<synchronous>, transform_indices = @transform_2, window_bounds = array<i64: 1, 32>}, {pipeline_mode = #tpu.pipeline_mode<synchronous>, transform_indices = @transform_3, window_bounds = array<i64: 1, 32>}, {transform_indices = @transform_4, window_bounds = array<i64: 1, 1>}, {transform_indices = @transform_5, window_bounds = array<i64: 1, 1, 128>}]} {
    %c0 = arith.constant 0 : index
    %c0_0 = arith.constant 0 : index
    %0 = vector.load %arg1[%c0, %c0_0] : memref<128x32xbf16, #tpu.memory_space<vmem>>, vector<128x32xbf16>
    %c0_1 = arith.constant 0 : index
    %c0_2 = arith.constant 0 : index
    %1 = vector.load %arg2[%c0_1, %c0_2] : memref<32x32xbf16, #tpu.memory_space<vmem>>, vector<32x32xbf16>
    %cst = arith.constant dense<0.000000e+00> : vector<128x32xf32>
    %2 = tpu.matmul %0, %1, %cst {dimension_numbers = #tpu.dot_dimension_numbers<[1], [0], [0], [1], [0, 0, 1, 1], [], []>} : vector<128x32xbf16>, vector<32x32xbf16>, vector<128x32xf32> -> vector<128x32xf32>
    %c0_3 = arith.constant 0 : index
    %c0_4 = arith.constant 0 : index
    %3 = vector.load %arg3[%c0_3, %c0_4] : memref<1x32xf32, #tpu.memory_space<vmem>>, vector<1x32xf32>
    %4 = vector.broadcast %3 : vector<1x32xf32> to vector<128x32xf32>
    %5 = arith.addf %2, %4 : vector<128x32xf32>
    %6 = math.tanh %5 : vector<128x32xf32>
    %c0_5 = arith.constant 0 : index
    %c0_6 = arith.constant 0 : index
    %7 = vector.load %arg4[%c0_5, %c0_6] : memref<1x32xf32, #tpu.memory_space<vmem>>, vector<1x32xf32>
    %8 = vector.broadcast %7 : vector<1x32xf32> to vector<128x32xf32>
    %9 = arith.mulf %6, %8 : vector<128x32xf32>
    %cst_7 = arith.constant dense<0.000000e+00> : vector<128xf32>
    %10 = vector.multi_reduction <add>, %9, %cst_7 [1] : vector<128x32xf32> to vector<128xf32>
    %c0_8 = arith.constant 0 : index
    %c0_9 = arith.constant 0 : index
    %11 = memref.load %arg5[%c0_8, %c0_9] : memref<1x1xf32, #tpu.memory_space<smem>>
    %12 = vector.broadcast %11 : f32 to vector<128xf32>
    %13 = arith.addf %10, %12 : vector<128xf32>
    %14 = vector.shape_cast %13 : vector<128xf32> to vector<1x1x128xf32>
    %c0_10 = arith.constant 0 : index
    %c0_11 = arith.constant 0 : index
    %c0_12 = arith.constant 0 : index
    %15 = vector.load %arg6[%c0_10, %c0_11, %c0_12] : memref<1x1x128xf32, #tpu.memory_space<vmem>>, vector<1x1x128xf32>
    tpu.vector_store %arg6[%c0_10, %c0_11, %c0_12], %14 {strides = array<i32>} : memref<1x1x128xf32, #tpu.memory_space<vmem>>, vector<1x1x128xf32>,
    return
  }
  func.func @transform_0(%arg0: i32) -> (i32, i32) {
    %c0_i32 = arith.constant 0 : i32
    %c0_i32_0 = arith.constant 0 : i32
    return %arg0, %c0_i32 : i32, i32
  }
  func.func @transform_1(%arg0: i32) -> (i32, i32) {
    %c0_i32 = arith.constant 0 : i32
    %c0_i32_0 = arith.constant 0 : i32
    %c0_i32_1 = arith.constant 0 : i32
    return %c0_i32, %c0_i32_0 : i32, i32
  }
  func.func @transform_2(%arg0: i32) -> (i32, i32) {
    %c0_i32 = arith.constant 0 : i32
    %c0_i32_0 = arith.constant 0 : i32
    %c0_i32_1 = arith.constant 0 : i32
    return %c0_i32, %c0_i32_0 : i32, i32
  }
  func.func @transform_3(%arg0: i32) -> (i32, i32) {
    %c0_i32 = arith.constant 0 : i32
    %c0_i32_0 = arith.constant 0 : i32
    %c0_i32_1 = arith.constant 0 : i32
    return %c0_i32, %c0_i32_0 : i32, i32
  }
  func.func @transform_4(%arg0: i32) -> (i32, i32) {
    %c0_i32 = arith.constant 0 : i32
    %c0_i32_0 = arith.constant 0 : i32
    %c0_i32_1 = arith.constant 0 : i32
    return %c0_i32, %c0_i32_0 : i32, i32
  }
  func.func @transform_5(%arg0: i32) -> (i32, i32, i32) {
    %c0_i32 = arith.constant 0 : i32
    %c0_i32_0 = arith.constant 0 : i32
    %c0_i32_1 = arith.constant 0 : i32
    return %arg0, %c0_i32, %c0_i32_0 : i32, i32, i32
  }
}

</mosaic_0001>

<llo_original>
// kernel: tpu_custom_call.1
$region0: #{tpu_custom_call.1}
  #allocation0 [shape = 'u32[]', space=smem, size = 0x4, offset = 0x4, fixed_abs, tag = 'smem constant byte address 0x4 - core index']
  #allocation1 [shape = 'u32[144,128]{1,0:T(1,128)}', space=vmem, size = 0x12000, scoped, tag = 'internal scratch']
  #allocation2 [shape = 'f32[1,1]{1,0:T(1,128)S(6)}', space=smem, size = 0x200, scoped, tag = 'scoped memory for tpu_custom_call.1']
  %s0 = inlined_call_operand.vmem [shape: bf16[128,32], index: 0, kind: input, shape index: {}]
  %s1 = inlined_call_operand.vmem [shape: bf16[32,32], index: 1, kind: input, shape index: {}]
  %s2 = inlined_call_operand.vmem [shape: f32[1,32], index: 2, kind: input, shape index: {}]
  %s3 = inlined_call_operand.vmem [shape: f32[1,32], index: 3, kind: input, shape index: {}]
  %s4 = inlined_call_operand.<no memory space> [shape: f32[1,1], index: 4, kind: input, shape index: {}]
  %s5 = inlined_call_operand.hbm [shape: f32[1,1,128], index: 5, kind: output, shape index: {}]
  %s6 = sld [smem:[#allocation0]]
  $region30: #{tpu_custom_call.1} parent=0
    _
  %s8 = ssub.s32 1, %s6
  %s9 = scalar_select 0, %s8, %s6
  %10 = sst [smem:[#allocation2]] %s4
  $region1: #{tpu_custom_call.1} parent=0
    #allocation3 [shape = 'u8[512]{0}', space=vmem, size = 0x400, scoped, tag = 'output window, operand 0, single buffered']
    #allocation4 [shape = 's32[1]{0}', space=sflag, size = 0x4, scoped, tag = 'scoped memory for tpu_custom_call.1']
    %11 = vsyncpa [#allocation4], 0
    // Predicated region
    $region2: #{tpu_custom_call.1} parent=1 // pred_check
      _
    $region3: #{tpu_custom_call.1} parent=1 // pred_check_branch
      %13 = sbr.rel (0) target = $region5
    $region4: #{tpu_custom_call.1} parent=1 // pred_region
      _
    $region5: #{tpu_custom_call.1} parent=1 // pred_fallthru
      _
    // Predicated region
    $region6: #{tpu_custom_call.1} parent=1 // pred_check
      _
    $region7: #{tpu_custom_call.1} parent=1 // pred_check_branch
      %15 = sbr.rel (0) target = $region9
    $region8: #{tpu_custom_call.1} parent=1 // pred_region
      _
    $region9: #{tpu_custom_call.1} parent=1 // pred_fallthru
      _
    // Predicated region
    $region10: #{tpu_custom_call.1} parent=1 // pred_check
      _
    $region11: #{tpu_custom_call.1} parent=1 // pred_check_branch
      %17 = sbr.rel (0) target = $region13
    $region12: #{tpu_custom_call.1} parent=1 // pred_region
      _
    $region13: #{tpu_custom_call.1} parent=1 // pred_fallthru
      _
    // Predicated region
    $region14: #{tpu_custom_call.1} parent=1 // pred_check
      _
    $region15: #{tpu_custom_call.1} parent=1 // pred_check_branch
      %19 = sbr.rel (0) target = $region17
    $region16: #{tpu_custom_call.1} parent=1 // pred_region
      _
    $region17: #{tpu_custom_call.1} parent=1 // pred_fallthru
      _
    // Predicated region
    $region18: #{tpu_custom_call.1} parent=1 // pred_check
      _
    $region19: #{tpu_custom_call.1} parent=1 // pred_check_branch
      %21 = sbr.rel (0) target = $region21
    $region20: #{tpu_custom_call.1} parent=1 // pred_region
      _
    $region21: #{tpu_custom_call.1} parent=1 // pred_fallthru
      _
    %v23 = vld [vmem:[%s0] sm:$0xf]
    %v24 = vld [vmem:[%s0 + $0x4] sm:$0xf]
    %v25 = vld [vmem:[%s0 + $0x8] sm:$0xf]
    %v26 = vld [vmem:[%s0 + $0xc] sm:$0xf]
    %v27 = vld [vmem:[%s0 + $0x10] sm:$0xf]
    %v28 = vld [vmem:[%s0 + $0x14] sm:$0xf]
    %v29 = vld [vmem:[%s0 + $0x18] sm:$0xf]
    %v30 = vld [vmem:[%s0 + $0x1c] sm:$0xf]
    %v31 = vld [vmem:[%s0 + $0x20] sm:$0xf]
    %v32 = vld [vmem:[%s0 + $0x24] sm:$0xf]
    %v33 = vld [vmem:[%s0 + $0x28] sm:$0xf]
    %v34 = vld [vmem:[%s0 + $0x2c] sm:$0xf]
    %v35 = vld [vmem:[%s0 + $0x30] sm:$0xf]
    %v36 = vld [vmem:[%s0 + $0x34] sm:$0xf]
    %v37 = vld [vmem:[%s0 + $0x38] sm:$0xf]
    %v38 = vld [vmem:[%s0 + $0x3c] sm:$0xf]
    %v39 = vld [vmem:[%s1] sm:$0xf]
    %v40 = vld [vmem:[%s1 + $0x4] sm:$0xf]
    %v41 = vld [vmem:[%s1 + $0x8] sm:$0xf]
    %v42 = vld [vmem:[%s1 + $0xc] sm:$0xf]
    %v43 = vld [vmem:[%s2] sm:$0x1]
    %v45 = vlaneseq
    %v46 = vshrl.u32 %v45, 7
    %v47 = vsub.s32 0, %v46
    %v48 = vrot.slane %v43, %v47
    %v66 = vunpack.c.l.b16 %v23
    %v67 = vunpack.c.l.b16 %v24
    %v68 = vunpack.c.l.b16 %v25
    %v69 = vunpack.c.l.b16 %v26
    %v70 = vunpack.c.l.b16 %v27
    %v71 = vunpack.c.l.b16 %v28
    %v72 = vunpack.c.l.b16 %v29
    %v73 = vunpack.c.l.b16 %v30
    %v74 = vunpack.c.l.b16 %v31
    %v75 = vunpack.c.l.b16 %v32
    %v76 = vunpack.c.l.b16 %v33
    %v77 = vunpack.c.l.b16 %v34
    %v78 = vunpack.c.l.b16 %v35
    %v79 = vunpack.c.l.b16 %v36
    %v80 = vunpack.c.l.b16 %v37
    %v81 = vunpack.c.l.b16 %v38
    %v82 = vpack.c.b16 %v67, %v66
    %v83 = vpack.c.b16 %v69, %v68
    %v84 = vpack.c.b16 %v71, %v70
    %v85 = vpack.c.b16 %v73, %v72
    %v86 = vpack.c.b16 %v75, %v74
    %v87 = vpack.c.b16 %v77, %v76
    %v88 = vpack.c.b16 %v79, %v78
    %v89 = vpack.c.b16 %v81, %v80
    %v94 = vunpack.c.l.b16 %v39
    %v95 = vunpack.c.l.b16 %v40
    %v96 = vunpack.c.l.b16 %v41
    %v97 = vunpack.c.l.b16 %v42
    %v98 = vpack.c.b16 %v95, %v94
    %v99 = vpack.c.b16 %v97, %v96
    %vm102 = vcmask 261120
    %v104 = vsel %vm102, %v82, 0
    %v107 = vsel %vm102, %v83, 0
    %v110 = vsel %vm102, %v84, 0
    %v113 = vsel %vm102, %v85, 0
    %v116 = vsel %vm102, %v86, 0
    %v119 = vsel %vm102, %v87, 0
    %v122 = vsel %vm102, %v88, 0
    %v125 = vsel %vm102, %v89, 0
    %127 = vmatprep.subr.bf16.mxu0 0
    %128 = vmatpush1.bf16.msra.mxu0 %v98
    %129 = vmatprep.subr.bf16.mxu0 0
    %130 = vmatpush1.bf16.msra.mxu0 %v99
    %131 = vmatprep.subr.bf16.mxu0 0
    %132 = vmatpush1.bf16.msra.mxu0 0
    %133 = vmatprep.subr.bf16.mxu0 0
    %134 = vmatpush1.bf16.msra.mxu0 0
    %135 = vmatprep.subr.bf16.mxu0 0
    %136 = vmatpush1.bf16.msra.mxu0 0
    %137 = vmatprep.subr.bf16.mxu0 0
    %138 = vmatpush1.bf16.msra.mxu0 0
    %139 = vmatprep.subr.bf16.mxu0 0
    %140 = vmatpush1.bf16.msra.mxu0 0
    %141 = vmatprep.subr.bf16.mxu0 0
    %142 = vmatpush1.bf16.msra.mxu0 0
    %143 = vmatprep.subr.bf16.mxu0 0
    %144 = vmatpush1.bf16.msra.mxu0 0
    %145 = vmatprep.subr.bf16.mxu0 0
    %146 = vmatpush1.bf16.msra.mxu0 0
    %147 = vmatprep.subr.bf16.mxu0 0
    %148 = vmatpush1.bf16.msra.mxu0 0
    %149 = vmatprep.subr.bf16.mxu0 0
    %150 = vmatpush1.bf16.msra.mxu0 0
    %151 = vmatprep.subr.bf16.mxu0 0
    %152 = vmatpush1.bf16.msra.mxu0 0
    %153 = vmatprep.subr.bf16.mxu0 0
    %154 = vmatpush1.bf16.msra.mxu0 0
    %155 = vmatprep.subr.bf16.mxu0 0
    %156 = vmatpush1.bf16.msra.mxu0 0
    %157 = vmatprep.subr.bf16.mxu0 0
    %158 = vmatpush1.bf16.msra.mxu0 0
    %159 = vmatprep.mubr.bf16.mxu0 0
    %160 = vmatmul.mubr.bf16.gmra.mrb[0].mxu0 %v104
    %v161 = vpop.f32.mrb[0].mxu0
    %v162 = vadd.f32 %v48, %v161
    %v163 = vpop.f32.mrb[0].mxu0
    %v164 = vpop.f32.mrb[0].mxu0
    %v165 = vadd.f32 %v48, %v164
    %v166 = vpop.f32.mrb[0].mxu0
    %167 = vmatprep.mubr.bf16.mxu0 0
    %168 = vmatmul.mubr.bf16.gmra.mrb[0].mxu0 %v107
    %v169 = vpop.f32.mrb[0].mxu0
    %v170 = vadd.f32 %v48, %v169
    %v171 = vpop.f32.mrb[0].mxu0
    %v172 = vpop.f32.mrb[0].mxu0
    %v173 = vadd.f32 %v48, %v172
    %v174 = vpop.f32.mrb[0].mxu0
    %175 = vmatprep.mubr.bf16.mxu0 0
    %176 = vmatmul.mubr.bf16.gmra.mrb[0].mxu0 %v110
    %v177 = vpop.f32.mrb[0].mxu0
    %v178 = vadd.f32 %v48, %v177
    %v179 = vpop.f32.mrb[0].mxu0
    %v180 = vpop.f32.mrb[0].mxu0
    %v181 = vadd.f32 %v48, %v180
    %v182 = vpop.f32.mrb[0].mxu0
    %183 = vmatprep.mubr.bf16.mxu0 0
    %184 = vmatmul.mubr.bf16.gmra.mrb[0].mxu0 %v113
    %v185 = vpop.f32.mrb[0].mxu0
    %v186 = vadd.f32 %v48, %v185
    %v187 = vpop.f32.mrb[0].mxu0
    %v188 = vpop.f32.mrb[0].mxu0
    %v189 = vadd.f32 %v48, %v188
    %v190 = vpop.f32.mrb[0].mxu0
    %191 = vmatprep.mubr.bf16.mxu0 0
    %192 = vmatmul.mubr.bf16.gmra.mrb[0].mxu0 %v116
    %v193 = vpop.f32.mrb[0].mxu0
    %v194 = vadd.f32 %v48, %v193
    %v195 = vpop.f32.mrb[0].mxu0
    %v196 = vpop.f32.mrb[0].mxu0
    %v197 = vadd.f32 %v48, %v196
    %v198 = vpop.f32.mrb[0].mxu0
    %199 = vmatprep.mubr.bf16.mxu0 0
    %200 = vmatmul.mubr.bf16.gmra.mrb[0].mxu0 %v119
    %v201 = vpop.f32.mrb[0].mxu0
    %v202 = vadd.f32 %v48, %v201
    %v203 = vpop.f32.mrb[0].mxu0
    %v204 = vpop.f32.mrb[0].mxu0
    %v205 = vadd.f32 %v48, %v204
    %v206 = vpop.f32.mrb[0].mxu0
    %207 = vmatprep.mubr.bf16.mxu0 0
    %208 = vmatmul.mubr.bf16.gmra.mrb[0].mxu0 %v122
    %v209 = vpop.f32.mrb[0].mxu0
    %v210 = vadd.f32 %v48, %v209
    %v211 = vpop.f32.mrb[0].mxu0
    %v212 = vpop.f32.mrb[0].mxu0
    %v213 = vadd.f32 %v48, %v212
    %v214 = vpop.f32.mrb[0].mxu0
    %215 = vmatprep.mubr.bf16.mxu0 0
    %216 = vmatmul.mubr.bf16.gmra.mrb[0].mxu0 %v125
    %v217 = vpop.f32.mrb[0].mxu0
    %v218 = vadd.f32 %v48, %v217
    %v219 = vpop.f32.mrb[0].mxu0
    %v220 = vpop.f32.mrb[0].mxu0
    %v221 = vadd.f32 %v48, %v220
    %v222 = vpop.f32.mrb[0].mxu0
    %223 = vdwg.mxu0
    %v224 = vtanh.pop %v162
    %v225 = vtanh.pop %v165
    %v226 = vtanh.pop %v170
    %v227 = vtanh.pop %v173
    %v228 = vtanh.pop %v178
    %v229 = vtanh.pop %v181
    %v230 = vtanh.pop %v186
    %v231 = vtanh.pop %v189
    %v232 = vtanh.pop %v194
    %v233 = vtanh.pop %v197
    %v234 = vtanh.pop %v202
    %v235 = vtanh.pop %v205
    %v236 = vtanh.pop %v210
    %v237 = vtanh.pop %v213
    %v238 = vtanh.pop %v218
    %v239 = vtanh.pop %v221
    %v240 = vld [vmem:[%s3] sm:$0x1]
    %v242 = vlaneseq
    %v243 = vshrl.u32 %v242, 7
    %v244 = vsub.s32 0, %v243
    %v245 = vrot.slane %v240, %v244
    %v247 = vmul.f32 %v224, %v245
    %v248 = vmul.f32 %v225, %v245
    %v249 = vmul.f32 %v226, %v245
    %v250 = vmul.f32 %v227, %v245
    %v251 = vmul.f32 %v228, %v245
    %v252 = vmul.f32 %v229, %v245
    %v253 = vmul.f32 %v230, %v245
    %v254 = vmul.f32 %v231, %v245
    %v255 = vmul.f32 %v232, %v245
    %v256 = vmul.f32 %v233, %v245
    %v257 = vmul.f32 %v234, %v245
    %v258 = vmul.f32 %v235, %v245
    %v259 = vmul.f32 %v236, %v245
    %v260 = vmul.f32 %v237, %v245
    %v261 = vmul.f32 %v238, %v245
    %v262 = vmul.f32 %v239, %v245
    %v263 = vsel %vm102, %v247, 0.0
    %264 = vadd.xlane.f32.xlu0 %v263
    %v265 = vpop.xlane.xlu0 %264
    %v266 = vsel %vm102, %v248, 0.0
    %267 = vadd.xlane.f32.xlu0 %v266
    %v268 = vpop.xlane.xlu0 %267
    %v269 = vsel %vm102, %v249, 0.0
    %270 = vadd.xlane.f32.xlu0 %v269
    %v271 = vpop.xlane.xlu0 %270
    %v272 = vsel %vm102, %v250, 0.0
    %273 = vadd.xlane.f32.xlu0 %v272
    %v274 = vpop.xlane.xlu0 %273
    %v275 = vsel %vm102, %v251, 0.0
    %276 = vadd.xlane.f32.xlu0 %v275
    %v277 = vpop.xlane.xlu0 %276
    %v278 = vsel %vm102, %v252, 0.0
    %279 = vadd.xlane.f32.xlu0 %v278
    %v280 = vpop.xlane.xlu0 %279
    %v281 = vsel %vm102, %v253, 0.0
    %282 = vadd.xlane.f32.xlu0 %v281
    %v283 = vpop.xlane.xlu0 %282
    %v284 = vsel %vm102, %v254, 0.0
    %285 = vadd.xlane.f32.xlu0 %v284
    %v286 = vpop.xlane.xlu0 %285
    %v287 = vsel %vm102, %v255, 0.0
    %288 = vadd.xlane.f32.xlu0 %v287
    %v289 = vpop.xlane.xlu0 %288
    %v290 = vsel %vm102, %v256, 0.0
    %291 = vadd.xlane.f32.xlu0 %v290
    %v292 = vpop.xlane.xlu0 %291
    %v293 = vsel %vm102, %v257, 0.0
    %294 = vadd.xlane.f32.xlu0 %v293
    %v295 = vpop.xlane.xlu0 %294
    %v296 = vsel %vm102, %v258, 0.0
    %297 = vadd.xlane.f32.xlu0 %v296
    %v298 = vpop.xlane.xlu0 %297
    %v299 = vsel %vm102, %v259, 0.0
    %300 = vadd.xlane.f32.xlu0 %v299
    %v301 = vpop.xlane.xlu0 %300
    %v302 = vsel %vm102, %v260, 0.0
    %303 = vadd.xlane.f32.xlu0 %v302
    %v304 = vpop.xlane.xlu0 %303
    %v305 = vsel %vm102, %v261, 0.0
    %306 = vadd.xlane.f32.xlu0 %v305
    %v307 = vpop.xlane.xlu0 %306
    %v308 = vsel %vm102, %v262, 0.0
    %309 = vadd.xlane.f32.xlu0 %v308
    %v310 = vpop.xlane.xlu0 %309
    %s311 = sld [smem:[#allocation2]]
    %v312 = vstv %s311
    %v313 = vadd.f32 %v265, %v312
    %v314 = vadd.f32 %v268, %v312
    %v315 = vadd.f32 %v271, %v312
    %v316 = vadd.f32 %v274, %v312
    %v317 = vadd.f32 %v277, %v312
    %v318 = vadd.f32 %v280, %v312
    %v319 = vadd.f32 %v283, %v312
    %v320 = vadd.f32 %v286, %v312
    %v321 = vadd.f32 %v289, %v312
    %v322 = vadd.f32 %v292, %v312
    %v323 = vadd.f32 %v295, %v312
    %v324 = vadd.f32 %v298, %v312
    %v325 = vadd.f32 %v301, %v312
    %v326 = vadd.f32 %v304, %v312
    %v327 = vadd.f32 %v307, %v312
    %v328 = vadd.f32 %v310, %v312
    %v345 = vlaneseq
    %v346 = vand.u32 %v345, 127
    %v347 = vlaneseq
    %v348 = vshrl.u32 %v347, 7
    %v349 = vsub.s32 %v346, %v348
    %v350 = vrot.slane %v313, %v349
    %v351 = vadd.s32 %v346, 4294967288
    %v352 = vlaneseq
    %v353 = vshrl.u32 %v352, 7
    %v354 = vsub.s32 %v351, %v353
    %v355 = vrot.slane %v314, %v354
    %vm356 = vcmask 130112
    %v357 = vsel %vm356, %v355, %v350
    %v358 = vadd.s32 %v346, 4294967280
    %v359 = vlaneseq
    %v360 = vshrl.u32 %v359, 7
    %v361 = vsub.s32 %v358, %v360
    %v362 = vrot.slane %v315, %v361
    %vm363 = vcmask 195712
    %v364 = vsel %vm363, %v362, %v357
    %v365 = vadd.s32 %v346, 4294967272
    %v366 = vlaneseq
    %v367 = vshrl.u32 %v366, 7
    %v368 = vsub.s32 %v365, %v367
    %v369 = vrot.slane %v316, %v368
    %vm370 = vcmask 261312
    %v371 = vsel %vm370, %v369, %v364
    %v372 = vadd.s32 %v346, 4294967264
    %v373 = vlaneseq
    %v374 = vshrl.u32 %v373, 7
    %v375 = vsub.s32 %v372, %v374
    %v376 = vrot.slane %v317, %v375
    %vm377 = vcmask 326912
    %v378 = vsel %vm377, %v376, %v371
    %v379 = vadd.s32 %v346, 4294967256
    %v380 = vlaneseq
    %v381 = vshrl.u32 %v380, 7
    %v382 = vsub.s32 %v379, %v381
    %v383 = vrot.slane %v318, %v382
    %vm384 = vcmask 392512
    %v385 = vsel %vm384, %v383, %v378
    %v386 = vadd.s32 %v346, 4294967248
    %v387 = vlaneseq
    %v388 = vshrl.u32 %v387, 7
    %v389 = vsub.s32 %v386, %v388
    %v390 = vrot.slane %v319, %v389
    %vm391 = vcmask 458112
    %v392 = vsel %vm391, %v390, %v385
    %v393 = vadd.s32 %v346, 4294967240
    %v394 = vlaneseq
    %v395 = vshrl.u32 %v394, 7
    %v396 = vsub.s32 %v393, %v395
    %v397 = vrot.slane %v320, %v396
    %vm398 = vcmask 523712
    %v399 = vsel %vm398, %v397, %v392
    %v400 = vadd.s32 %v346, 4294967232
    %v401 = vlaneseq
    %v402 = vshrl.u32 %v401, 7
    %v403 = vsub.s32 %v400, %v402
    %v404 = vrot.slane %v321, %v403
    %vm405 = vcmask 589312
    %v406 = vsel %vm405, %v404, %v399
    %v407 = vadd.s32 %v346, 4294967224
    %v408 = vlaneseq
    %v409 = vshrl.u32 %v408, 7
    %v410 = vsub.s32 %v407, %v409
    %v411 = vrot.slane %v322, %v410
    %vm412 = vcmask 654912
    %v413 = vsel %vm412, %v411, %v406
    %v414 = vadd.s32 %v346, 4294967216
    %v415 = vlaneseq
    %v416 = vshrl.u32 %v415, 7
    %v417 = vsub.s32 %v414, %v416
    %v418 = vrot.slane %v323, %v417
    %vm419 = vcmask 720512
    %v420 = vsel %vm419, %v418, %v413
    %v421 = vadd.s32 %v346, 4294967208
    %v422 = vlaneseq
    %v423 = vshrl.u32 %v422, 7
    %v424 = vsub.s32 %v421, %v423
    %v425 = vrot.slane %v324, %v424
    %vm426 = vcmask 786112
    %v427 = vsel %vm426, %v425, %v420
    %v428 = vadd.s32 %v346, 4294967200
    %v429 = vlaneseq
    %v430 = vshrl.u32 %v429, 7
    %v431 = vsub.s32 %v428, %v430
    %v432 = vrot.slane %v325, %v431
    %vm433 = vcmask 851712
    %v434 = vsel %vm433, %v432, %v427
    %v435 = vadd.s32 %v346, 4294967192
    %v436 = vlaneseq
    %v437 = vshrl.u32 %v436, 7
    %v438 = vsub.s32 %v435, %v437
    %v439 = vrot.slane %v326, %v438
    %vm440 = vcmask 917312
    %v441 = vsel %vm440, %v439, %v434
    %v442 = vadd.s32 %v346, 4294967184
    %v443 = vlaneseq
    %v444 = vshrl.u32 %v443, 7
    %v445 = vsub.s32 %v442, %v444
    %v446 = vrot.slane %v327, %v445
    %vm447 = vcmask 982912
    %v448 = vsel %vm447, %v446, %v441
    %v449 = vadd.s32 %v346, 4294967176
    %v450 = vlaneseq
    %v451 = vshrl.u32 %v450, 7
    %v452 = vsub.s32 %v449, %v451
    %v453 = vrot.slane %v328, %v452
    %vm454 = vcmask 1048512
    %v455 = vsel %vm454, %v453, %v448
    %457 = vst [vmem:[#allocation3] sm:$0x1] %v455
    // Predicated region
    $region22: #{tpu_custom_call.1} parent=1 // pred_check
      _
    $region23: #{tpu_custom_call.1} parent=1 // pred_check_branch
      %459 = sbr.rel (0) target = $region25
    $region24: #{tpu_custom_call.1} parent=1 // pred_region
      %s461 = ssub.s32 16, 16
      %462 = vsyncadd [#allocation4], %s461
      %s464 = sshll.u32 [#allocation3], 4
      %s465 = int_to_ptr.vmem [resolvable:$true] %s464
      %467 = dma.vmem_to_hbm [thread:$0]  %s465, 16, %s5, [#allocation4]
    $region25: #{tpu_custom_call.1} parent=1 // pred_fallthru
      _
    // Predicated region
    $region26: #{tpu_custom_call.1} parent=1 // pred_check
      _
    $region27: #{tpu_custom_call.1} parent=1 // pred_check_branch
      %469 = sbr.rel (0) target = $region29
    $region28: #{tpu_custom_call.1} parent=1 // pred_region
      %470 = dma.done [#allocation4], 16
    $region29: #{tpu_custom_call.1} parent=1 // pred_fallthru
      _
    %471 = vsyncpa [#allocation4], 1

</llo_original>
